<compile_context>
chip_gen: v7x
topology: tpu7x:2x2x1
jax: 0.10.0
libtpu: 0.0.40
codegen_flags: <defaults>
</compile_context>

<pallas_src>
import jax
import jax.numpy as jnp
from jax.experimental import pallas as pl
from jax.experimental.pallas import tpu as pltpu


LANE = 128                  # TPU lane width (last-dim tile)
SUBLANE = 8                 # TPU sublane width (second-to-last-dim tile)
DEFAULT_BLOCK_BATCH = 1024  # ~few-hundred-KiB tile; >85% pipeline efficiency
NEG_BIG = -1.0e30           # bias for padded action lanes -> exp() == 0


def _round_up(x, m):
    return ((x + m - 1) // m) * m


def _choose_batch_tile(batch, block_batch):
    """Pick a multiple-of-8 batch tile, clamped to the batch, with >=2 grid
    steps when the batch is big enough (keeps v7x's 2nd TensorCore busy)."""
    tm = max(SUBLANE, (int(block_batch) // SUBLANE) * SUBLANE)
    if batch >= 2 * SUBLANE:
        # ensure at least two grid steps so the "parallel" axis can be
        # sharded across TensorCores on v7x (free on v5e/v6e).
        tm = min(tm, _round_up(pl.cdiv(batch, 2), SUBLANE))
    tm = min(tm, _round_up(batch, SUBLANE))
    return tm


def actor_kernel(x_ref, w1_ref, b1_ref, w2_ref, b2_ref, w3_ref, b3_ref, out_ref):
    # x / weights are bf16 (MXU-native); accumulation and all elementwise
    # math (bias, ReLU, softmax) stay in f32 (no bf16 VPU/EUP on v5e).
    x = x_ref[...]

    # fc1 + ReLU
    h1 = jnp.dot(x, w1_ref[...], preferred_element_type=jnp.float32) + b1_ref[...]
    h1 = jnp.maximum(h1, 0.0).astype(jnp.bfloat16)

    # fc2 + ReLU
    h2 = jnp.dot(h1, w2_ref[...], preferred_element_type=jnp.float32) + b2_ref[...]
    h2 = jnp.maximum(h2, 0.0).astype(jnp.bfloat16)

    # fc3 + softmax(dim=-1), numerically stable.
    # Padded action lanes carry a -1e30 bias, so exp() is exactly 0 there and
    # the softmax over the full 128-lane block equals softmax over the real
    # A lanes; the store stays lane-dense (unmasked 128-wide vst).
    logits = jnp.dot(h2, w3_ref[...], preferred_element_type=jnp.float32) + b3_ref[...]
    m = jnp.max(logits, axis=-1, keepdims=True)
    e = jnp.exp(logits - m)
    denom = jnp.sum(e, axis=-1, keepdims=True)
    inv = pl.reciprocal(denom, approx=True)   # EUP slot, frees the VALU
    out_ref[...] = (e * inv).astype(out_ref.dtype)


def actor_forward(state, params, *, block_batch=DEFAULT_BLOCK_BATCH):
    """Run the Actor forward pass with a Pallas TPU kernel.

    state: (B, state_dim) float32
    params: dict with w1 (S,128), b1 (1,128), w2 (128,64), b2 (1,64),
            w3 (64,A), b3 (1,A)   (weights transposed vs PyTorch)
    returns: (B, A) float32 action probabilities (rows sum to 1)
    """
    B, S = state.shape
    H1 = params["w1"].shape[1]
    H2 = params["w2"].shape[1]
    A = params["w3"].shape[1]
    A_pad = _round_up(A, LANE)

    # bf16 MXU operands; biases stay f32.
    x = state.astype(jnp.bfloat16)
    w1 = params["w1"].astype(jnp.bfloat16)
    w2 = params["w2"].astype(jnp.bfloat16)
    b1 = params["b1"].astype(jnp.float32)
    b2 = params["b2"].astype(jnp.float32)
    # Pad the last layer to a lane-dense (…,128) output: zero weight columns
    # plus a very negative bias in the padded lanes kills them in the softmax.
    w3 = jnp.zeros((H2, A_pad), jnp.bfloat16).at[:, :A].set(
        params["w3"].astype(jnp.bfloat16))
    b3 = jnp.full((1, A_pad), NEG_BIG, jnp.float32).at[:, :A].set(
        params["b3"].astype(jnp.float32))

    tm = _choose_batch_tile(B, block_batch)
    grid = (pl.cdiv(B, tm),)

    const = lambda i: (0, 0)  # weights/biases: same block for every batch tile
    # NOTE: constant index_map -> weights/biases are fetched into VMEM once and
    # stay resident across every batch tile.

    out_padded = pl.pallas_call(
        actor_kernel,
        out_shape=jax.ShapeDtypeStruct((B, A_pad), jnp.float32),
        grid_spec=pltpu.PrefetchScalarGridSpec(
            num_scalar_prefetch=0,
            grid=grid,
            in_specs=[
                pl.BlockSpec((tm, S), lambda i: (i, 0)),    # state tile (bf16)
                pl.BlockSpec((S, H1), const),               # w1
                pl.BlockSpec((1, H1), const),               # b1
                pl.BlockSpec((H1, H2), const),               # w2
                pl.BlockSpec((1, H2), const),               # b2
                pl.BlockSpec((H2, A_pad), const),            # w3 (lane-padded)
                pl.BlockSpec((1, A_pad), const),             # b3 (lane-padded)
            ],
            out_specs=pl.BlockSpec((tm, A_pad), lambda i: (i, 0)),
        ),
        compiler_params=pltpu.CompilerParams(
            dimension_semantics=("parallel",),
        ),
    )(x, w1, b1, w2, b2, w3, b3)

    return out_padded[:, :A]


def init_actor_params(key, state_dim, action_dim):
    """Deterministic init mimicking PyTorch nn.Linear default
    (U[-1/sqrt(fan_in), 1/sqrt(fan_in)]); weights stored as (in, out)."""
    def linear(key, fan_in, fan_out):
        kw, kb = jax.random.split(key)
        bound = 1.0 / (fan_in ** 0.5)
        w = jax.random.uniform(kw, (fan_in, fan_out), jnp.float32, -bound, bound)
        b = jax.random.uniform(kb, (1, fan_out), jnp.float32, -bound, bound)
        return w, b

    k1, k2, k3 = jax.random.split(key, 3)
    w1, b1 = linear(k1, state_dim, 128)
    w2, b2 = linear(k2, 128, 64)
    w3, b3 = linear(k3, 64, action_dim)
    return {"w1": w1, "b1": b1, "w2": w2, "b2": b2, "w3": w3, "b3": b3}


def actor_reference_f32(state, params):
    """Pure-JAX f32 reference (matches the PyTorch module exactly)."""
    h1 = jnp.maximum(state @ params["w1"] + params["b1"], 0.0)
    h2 = jnp.maximum(h1 @ params["w2"] + params["b2"], 0.0)
    logits = h2 @ params["w3"] + params["b3"]
    return jax.nn.softmax(logits, axis=-1)


def actor_reference_bf16(state, params):
    """Pure-JAX reference matching the kernel's precision choices
    (bf16 MXU operands, f32 accumulate / bias / softmax)."""
    f32 = jnp.float32
    x = state.astype(jnp.bfloat16)
    w1 = params["w1"].astype(jnp.bfloat16)
    w2 = params["w2"].astype(jnp.bfloat16)
    w3 = params["w3"].astype(jnp.bfloat16)
    h1 = jnp.maximum(
        jnp.dot(x, w1, preferred_element_type=f32) + params["b1"], 0.0
    ).astype(jnp.bfloat16)
    h2 = jnp.maximum(
        jnp.dot(h1, w2, preferred_element_type=f32) + params["b2"], 0.0
    ).astype(jnp.bfloat16)
    logits = jnp.dot(h2, w3, preferred_element_type=f32) + params["b3"]
    return jax.nn.softmax(logits, axis=-1)


if __name__ == "__main__":
    key = jax.random.PRNGKey(0)
    k_params, k_state = jax.random.split(key)

    batch = 8
    state_dim = 16
    action_dim = 4

    params = init_actor_params(k_params, state_dim, action_dim)
    state = jax.random.normal(k_state, (batch, state_dim), jnp.float32)

    # jit the wrapper so weight padding / casts fuse around the kernel call.
    actor_forward_jit = jax.jit(lambda s, p: actor_forward(s, p))

    probs = actor_forward_jit(state, params)
    probs = jax.block_until_ready(probs)

    assert probs.shape == (batch, action_dim)

    # Match the kernel's bf16/MXU precision choices (tight tolerance)…
    ref_bf16 = actor_reference_bf16(state, params)
    assert jnp.allclose(probs, ref_bf16, atol=5e-3, rtol=5e-3)
    # …and stay close to the full-f32 PyTorch-equivalent math (loose).
    ref_f32 = actor_reference_f32(state, params)
    assert jnp.allclose(probs, ref_f32, atol=5e-2, rtol=5e-2)
    # Rows sum to 1 (up to approx-reciprocal error ~2^-12).
    assert jnp.allclose(jnp.sum(probs, axis=-1), 1.0, atol=5e-3)

    print("KERNEL_OK")
</pallas_src>

<mosaic_0001>
module attributes {stable_mosaic.version = 11 : i64} {
  func.func @actor_kernel(%arg0: i32, %arg1: memref<8x16xbf16, #tpu.memory_space<vmem>>, %arg2: memref<16x128xbf16, #tpu.memory_space<vmem>>, %arg3: memref<1x128xf32, #tpu.memory_space<vmem>>, %arg4: memref<128x64xbf16, #tpu.memory_space<vmem>>, %arg5: memref<1x64xf32, #tpu.memory_space<vmem>>, %arg6: memref<64x128xbf16, #tpu.memory_space<vmem>>, %arg7: memref<1x128xf32, #tpu.memory_space<vmem>>, %arg8: memref<8x128xf32, #tpu.memory_space<vmem>>) attributes {dimension_semantics = [#tpu.dimension_semantics<parallel>], iteration_bounds = array<i64: 1>, scalar_prefetch = 0 : i64, scratch_operands = 0 : i64, tpu.core_type = #tpu.core_type<tc>, window_params = [{transform_indices = @transform_0, window_bounds = array<i64: 8, 16>}, {pipeline_mode = #tpu.pipeline_mode<synchronous>, transform_indices = @transform_1, window_bounds = array<i64: 16, 128>}, {pipeline_mode = #tpu.pipeline_mode<synchronous>, transform_indices = @transform_2, window_bounds = array<i64: 1, 128>}, {pipeline_mode = #tpu.pipeline_mode<synchronous>, transform_indices = @transform_3, window_bounds = array<i64: 128, 64>}, {pipeline_mode = #tpu.pipeline_mode<synchronous>, transform_indices = @transform_4, window_bounds = array<i64: 1, 64>}, {pipeline_mode = #tpu.pipeline_mode<synchronous>, transform_indices = @transform_5, window_bounds = array<i64: 64, 128>}, {pipeline_mode = #tpu.pipeline_mode<synchronous>, transform_indices = @transform_6, window_bounds = array<i64: 1, 128>}, {transform_indices = @transform_7, window_bounds = array<i64: 8, 128>}]} {
    %c0 = arith.constant 0 : index
    %c0_0 = arith.constant 0 : index
    %0 = vector.load %arg1[%c0, %c0_0] : memref<8x16xbf16, #tpu.memory_space<vmem>>, vector<8x16xbf16>
    %c0_1 = arith.constant 0 : index
    %c0_2 = arith.constant 0 : index
    %1 = vector.load %arg2[%c0_1, %c0_2] : memref<16x128xbf16, #tpu.memory_space<vmem>>, vector<16x128xbf16>
    %cst = arith.constant dense<0.000000e+00> : vector<8x128xf32>
    %2 = tpu.matmul %0, %1, %cst {dimension_numbers = #tpu.dot_dimension_numbers<[1], [0], [0], [1], [0, 0, 1, 1], [], []>} : vector<8x16xbf16>, vector<16x128xbf16>, vector<8x128xf32> -> vector<8x128xf32>
    %c0_3 = arith.constant 0 : index
    %c0_4 = arith.constant 0 : index
    %3 = vector.load %arg3[%c0_3, %c0_4] : memref<1x128xf32, #tpu.memory_space<vmem>>, vector<1x128xf32>
    %4 = vector.broadcast %3 : vector<1x128xf32> to vector<8x128xf32>
    %5 = arith.addf %2, %4 : vector<8x128xf32>
    %cst_5 = arith.constant 0.000000e+00 : f32
    %6 = vector.broadcast %cst_5 : f32 to vector<8x128xf32>
    %7 = arith.maximumf %5, %6 : vector<8x128xf32>
    %8 = arith.truncf %7 : vector<8x128xf32> to vector<8x128xbf16>
    %c0_6 = arith.constant 0 : index
    %c0_7 = arith.constant 0 : index
    %9 = vector.load %arg4[%c0_6, %c0_7] : memref<128x64xbf16, #tpu.memory_space<vmem>>, vector<128x64xbf16>
    %cst_8 = arith.constant dense<0.000000e+00> : vector<8x64xf32>
    %10 = tpu.matmul %8, %9, %cst_8 {dimension_numbers = #tpu.dot_dimension_numbers<[1], [0], [0], [1], [0, 0, 1, 1], [], []>} : vector<8x128xbf16>, vector<128x64xbf16>, vector<8x64xf32> -> vector<8x64xf32>
    %c0_9 = arith.constant 0 : index
    %c0_10 = arith.constant 0 : index
    %11 = vector.load %arg5[%c0_9, %c0_10] : memref<1x64xf32, #tpu.memory_space<vmem>>, vector<1x64xf32>
    %12 = vector.broadcast %11 : vector<1x64xf32> to vector<8x64xf32>
    %13 = arith.addf %10, %12 : vector<8x64xf32>
    %cst_11 = arith.constant 0.000000e+00 : f32
    %14 = vector.broadcast %cst_11 : f32 to vector<8x64xf32>
    %15 = arith.maximumf %13, %14 : vector<8x64xf32>
    %16 = arith.truncf %15 : vector<8x64xf32> to vector<8x64xbf16>
    %c0_12 = arith.constant 0 : index
    %c0_13 = arith.constant 0 : index
    %17 = vector.load %arg6[%c0_12, %c0_13] : memref<64x128xbf16, #tpu.memory_space<vmem>>, vector<64x128xbf16>
    %cst_14 = arith.constant dense<0.000000e+00> : vector<8x128xf32>
    %18 = tpu.matmul %16, %17, %cst_14 {dimension_numbers = #tpu.dot_dimension_numbers<[1], [0], [0], [1], [0, 0, 1, 1], [], []>} : vector<8x64xbf16>, vector<64x128xbf16>, vector<8x128xf32> -> vector<8x128xf32>
    %c0_15 = arith.constant 0 : index
    %c0_16 = arith.constant 0 : index
    %19 = vector.load %arg7[%c0_15, %c0_16] : memref<1x128xf32, #tpu.memory_space<vmem>>, vector<1x128xf32>
    %20 = vector.broadcast %19 : vector<1x128xf32> to vector<8x128xf32>
    %21 = arith.addf %18, %20 : vector<8x128xf32>
    %cst_17 = arith.constant dense<0xFF800000> : vector<8xf32>
    %22 = vector.multi_reduction <maximumf>, %21, %cst_17 [1] : vector<8x128xf32> to vector<8xf32>
    %23 = vector.shape_cast %22 : vector<8xf32> to vector<8x1xf32>
    %24 = vector.broadcast %23 : vector<8x1xf32> to vector<8x128xf32>
    %25 = arith.subf %21, %24 : vector<8x128xf32>
    %26 = math.exp %25 : vector<8x128xf32>
    %cst_18 = arith.constant dense<0.000000e+00> : vector<8xf32>
    %27 = vector.multi_reduction <add>, %26, %cst_18 [1] : vector<8x128xf32> to vector<8xf32>
    %28 = vector.shape_cast %27 : vector<8xf32> to vector<8x1xf32>
    %29 = tpu.reciprocal %28 {approx = true} : vector<8x1xf32> -> vector<8x1xf32>
    %30 = vector.broadcast %29 : vector<8x1xf32> to vector<8x128xf32>
    %31 = arith.mulf %26, %30 : vector<8x128xf32>
    %c0_19 = arith.constant 0 : index
    %c0_20 = arith.constant 0 : index
    %32 = vector.load %arg8[%c0_19, %c0_20] : memref<8x128xf32, #tpu.memory_space<vmem>>, vector<8x128xf32>
    tpu.vector_store %arg8[%c0_19, %c0_20], %31 {strides = array<i32>} : memref<8x128xf32, #tpu.memory_space<vmem>>, vector<8x128xf32>,
    return
  }
  func.func @transform_0(%arg0: i32) -> (i32, i32) {
    %c0_i32 = arith.constant 0 : i32
    %c0_i32_0 = arith.constant 0 : i32
    return %arg0, %c0_i32 : i32, i32
  }
  func.func @transform_1(%arg0: i32) -> (i32, i32) {
    %c0_i32 = arith.constant 0 : i32
    %c0_i32_0 = arith.constant 0 : i32
    %c0_i32_1 = arith.constant 0 : i32
    return %c0_i32, %c0_i32_0 : i32, i32
  }
  func.func @transform_2(%arg0: i32) -> (i32, i32) {
    %c0_i32 = arith.constant 0 : i32
    %c0_i32_0 = arith.constant 0 : i32
    %c0_i32_1 = arith.constant 0 : i32
    return %c0_i32, %c0_i32_0 : i32, i32
  }
  func.func @transform_3(%arg0: i32) -> (i32, i32) {
    %c0_i32 = arith.constant 0 : i32
    %c0_i32_0 = arith.constant 0 : i32
    %c0_i32_1 = arith.constant 0 : i32
    return %c0_i32, %c0_i32_0 : i32, i32
  }
  func.func @transform_4(%arg0: i32) -> (i32, i32) {
    %c0_i32 = arith.constant 0 : i32
    %c0_i32_0 = arith.constant 0 : i32
    %c0_i32_1 = arith.constant 0 : i32
    return %c0_i32, %c0_i32_0 : i32, i32
  }
  func.func @transform_5(%arg0: i32) -> (i32, i32) {
    %c0_i32 = arith.constant 0 : i32
    %c0_i32_0 = arith.constant 0 : i32
    %c0_i32_1 = arith.constant 0 : i32
    return %c0_i32, %c0_i32_0 : i32, i32
  }
  func.func @transform_6(%arg0: i32) -> (i32, i32) {
    %c0_i32 = arith.constant 0 : i32
    %c0_i32_0 = arith.constant 0 : i32
    %c0_i32_1 = arith.constant 0 : i32
    return %c0_i32, %c0_i32_0 : i32, i32
  }
  func.func @transform_7(%arg0: i32) -> (i32, i32) {
    %c0_i32 = arith.constant 0 : i32
    %c0_i32_0 = arith.constant 0 : i32
    return %arg0, %c0_i32 : i32, i32
  }
}

</mosaic_0001>

<llo_original>
// kernel: _lambda_.1
$region0: #{_lambda_.1}
  #allocation0 [shape = 'u32[]', space=smem, size = 0x4, offset = 0x4, fixed_abs, tag = 'smem constant byte address 0x4 - core index']
  #allocation1 [shape = 'u32[144,128]{1,0:T(1,128)}', space=vmem, size = 0x12000, scoped, tag = 'internal scratch']
  %s0 = inlined_call_operand.vmem [shape: bf16[8,16], index: 0, kind: input, shape index: {}]
  %s1 = inlined_call_operand.vmem [shape: bf16[16,128], index: 1, kind: input, shape index: {}]
  %s2 = inlined_call_operand.vmem [shape: f32[1,128], index: 2, kind: input, shape index: {}]
  %s3 = inlined_call_operand.vmem [shape: bf16[128,64], index: 3, kind: input, shape index: {}]
  %s4 = inlined_call_operand.vmem [shape: f32[1,64], index: 4, kind: input, shape index: {}]
  %s5 = inlined_call_operand.vmem [shape: bf16[64,128], index: 5, kind: input, shape index: {}]
  %s6 = inlined_call_operand.vmem [shape: f32[1,128], index: 6, kind: input, shape index: {}]
  %s7 = inlined_call_operand.vmem [shape: f32[8,128], index: 7, kind: output, shape index: {}]
  %s8 = sld [smem:[#allocation0]]
  $region38: #{_lambda_.1} parent=0
    _
  %s10 = ssub.s32 1, %s8
  %s11 = scalar_select 0, %s10, %s8
  // Predicated region
  $region2: #{_lambda_.1} parent=0 // pred_check
    _
  $region3: #{_lambda_.1} parent=0 // pred_check_branch
    %13 = sbr.rel (0) target = $region5
  $region4: #{_lambda_.1} parent=0 // pred_region
    _
  $region5: #{_lambda_.1} parent=0 // pred_fallthru
    _
  // Predicated region
  $region6: #{_lambda_.1} parent=0 // pred_check
    _
  $region7: #{_lambda_.1} parent=0 // pred_check_branch
    %15 = sbr.rel (0) target = $region9
  $region8: #{_lambda_.1} parent=0 // pred_region
    _
  $region9: #{_lambda_.1} parent=0 // pred_fallthru
    _
  // Predicated region
  $region10: #{_lambda_.1} parent=0 // pred_check
    _
  $region11: #{_lambda_.1} parent=0 // pred_check_branch
    %17 = sbr.rel (0) target = $region13
  $region12: #{_lambda_.1} parent=0 // pred_region
    _
  $region13: #{_lambda_.1} parent=0 // pred_fallthru
    _
  // Predicated region
  $region14: #{_lambda_.1} parent=0 // pred_check
    _
  $region15: #{_lambda_.1} parent=0 // pred_check_branch
    %19 = sbr.rel (0) target = $region17
  $region16: #{_lambda_.1} parent=0 // pred_region
    _
  $region17: #{_lambda_.1} parent=0 // pred_fallthru
    _
  // Predicated region
  $region18: #{_lambda_.1} parent=0 // pred_check
    _
  $region19: #{_lambda_.1} parent=0 // pred_check_branch
    %21 = sbr.rel (0) target = $region21
  $region20: #{_lambda_.1} parent=0 // pred_region
    _
  $region21: #{_lambda_.1} parent=0 // pred_fallthru
    _
  // Predicated region
  $region22: #{_lambda_.1} parent=0 // pred_check
    _
  $region23: #{_lambda_.1} parent=0 // pred_check_branch
    %23 = sbr.rel (0) target = $region25
  $region24: #{_lambda_.1} parent=0 // pred_region
    _
  $region25: #{_lambda_.1} parent=0 // pred_fallthru
    _
  // Predicated region
  $region26: #{_lambda_.1} parent=0 // pred_check
    _
  $region27: #{_lambda_.1} parent=0 // pred_check_branch
    %25 = sbr.rel (0) target = $region29
  $region28: #{_lambda_.1} parent=0 // pred_region
    _
  $region29: #{_lambda_.1} parent=0 // pred_fallthru
    _
  %v27 = vld [vmem:[%s0] sm:$0xf]
  %v28 = vld [vmem:[%s1] sm:$0xf]
  %v29 = vld [vmem:[%s1 + $0x4] sm:$0xf]
  %v30 = vld [vmem:[%s2] sm:$0x1]
  %v32 = vlaneseq
  %v33 = vshrl.u32 %v32, 7
  %v34 = vsub.s32 0, %v33
  %v35 = vrot.slane %v30, %v34
  %v39 = vunpack.c.l.b16 %v28
  %v40 = vunpack.c.l.b16 %v29
  %v41 = vpack.c.b16 %v40, %v39
  %vm43 = vcmask 130048
  %v45 = vsel %vm43, %v27, 0
  %47 = vmatprep.subr.bf16.mxu0 0
  %48 = vmatpush1.bf16.msra.mxu0 %v41
  %49 = vmatprep.subr.bf16.mxu0 0
  %50 = vmatpush1.bf16.msra.mxu0 0
  %51 = vmatprep.subr.bf16.mxu0 0
  %52 = vmatpush1.bf16.msra.mxu0 0
  %53 = vmatprep.subr.bf16.mxu0 0
  %54 = vmatpush1.bf16.msra.mxu0 0
  %55 = vmatprep.subr.bf16.mxu0 0
  %56 = vmatpush1.bf16.msra.mxu0 0
  %57 = vmatprep.subr.bf16.mxu0 0
  %58 = vmatpush1.bf16.msra.mxu0 0
  %59 = vmatprep.subr.bf16.mxu0 0
  %60 = vmatpush1.bf16.msra.mxu0 0
  %61 = vmatprep.subr.bf16.mxu0 0
  %62 = vmatpush1.bf16.msra.mxu0 0
  %63 = vmatprep.subr.bf16.mxu0 0
  %64 = vmatpush1.bf16.msra.mxu0 0
  %65 = vmatprep.subr.bf16.mxu0 0
  %66 = vmatpush1.bf16.msra.mxu0 0
  %67 = vmatprep.subr.bf16.mxu0 0
  %68 = vmatpush1.bf16.msra.mxu0 0
  %69 = vmatprep.subr.bf16.mxu0 0
  %70 = vmatpush1.bf16.msra.mxu0 0
  %71 = vmatprep.subr.bf16.mxu0 0
  %72 = vmatpush1.bf16.msra.mxu0 0
  %73 = vmatprep.subr.bf16.mxu0 0
  %74 = vmatpush1.bf16.msra.mxu0 0
  %75 = vmatprep.subr.bf16.mxu0 0
  %76 = vmatpush1.bf16.msra.mxu0 0
  %77 = vmatprep.subr.bf16.mxu0 0
  %78 = vmatpush1.bf16.msra.mxu0 0
  %79 = vmatprep.mubr.bf16.mxu0 0
  %80 = vmatmul.mubr.bf16.gmra.mrb[0].mxu0 %v45
  %v81 = vpop.f32.mrb[0].mxu0
  %v82 = vadd.f32 %v35, %v81
  %v83 = vpop.f32.mrb[0].mxu0
  %v84 = vpop.f32.mrb[0].mxu0
  %v85 = vpop.f32.mrb[0].mxu0
  %86 = vdwg.mxu0
  %v87 = vmax.f32 %v82, 0.0
  %v88 = vpack.c.bf16 %v87, %v87
  %v89 = vld [vmem:[%s3] sm:$0xf]
  %v90 = vld [vmem:[%s3 + $0x4] sm:$0xf]
  %v91 = vld [vmem:[%s3 + $0x8] sm:$0xf]
  %v92 = vld [vmem:[%s3 + $0xc] sm:$0xf]
  %v93 = vld [vmem:[%s3 + $0x10] sm:$0xf]
  %v94 = vld [vmem:[%s3 + $0x14] sm:$0xf]
  %v95 = vld [vmem:[%s3 + $0x18] sm:$0xf]
  %v96 = vld [vmem:[%s3 + $0x1c] sm:$0xf]
  %v97 = vld [vmem:[%s3 + $0x20] sm:$0xf]
  %v98 = vld [vmem:[%s3 + $0x24] sm:$0xf]
  %v99 = vld [vmem:[%s3 + $0x28] sm:$0xf]
  %v100 = vld [vmem:[%s3 + $0x2c] sm:$0xf]
  %v101 = vld [vmem:[%s3 + $0x30] sm:$0xf]
  %v102 = vld [vmem:[%s3 + $0x34] sm:$0xf]
  %v103 = vld [vmem:[%s3 + $0x38] sm:$0xf]
  %v104 = vld [vmem:[%s3 + $0x3c] sm:$0xf]
  %v105 = vld [vmem:[%s4] sm:$0x1]
  %v107 = vlaneseq
  %v108 = vshrl.u32 %v107, 7
  %v109 = vsub.s32 0, %v108
  %v110 = vrot.slane %v105, %v109
  %v128 = vunpack.c.l.b16 %v89
  %v129 = vunpack.c.l.b16 %v90
  %v130 = vunpack.c.l.b16 %v91
  %v131 = vunpack.c.l.b16 %v92
  %v132 = vunpack.c.l.b16 %v93
  %v133 = vunpack.c.l.b16 %v94
  %v134 = vunpack.c.l.b16 %v95
  %v135 = vunpack.c.l.b16 %v96
  %v136 = vunpack.c.l.b16 %v97
  %v137 = vunpack.c.l.b16 %v98
  %v138 = vunpack.c.l.b16 %v99
  %v139 = vunpack.c.l.b16 %v100
  %v140 = vunpack.c.l.b16 %v101
  %v141 = vunpack.c.l.b16 %v102
  %v142 = vunpack.c.l.b16 %v103
  %v143 = vunpack.c.l.b16 %v104
  %v144 = vpack.c.b16 %v129, %v128
  %v145 = vpack.c.b16 %v131, %v130
  %v146 = vpack.c.b16 %v133, %v132
  %v147 = vpack.c.b16 %v135, %v134
  %v148 = vpack.c.b16 %v137, %v136
  %v149 = vpack.c.b16 %v139, %v138
  %v150 = vpack.c.b16 %v141, %v140
  %v151 = vpack.c.b16 %v143, %v142
  %160 = vmatprep.subr.bf16.mxu0 0
  %161 = vmatpush1.bf16.msra.mxu0 %v144
  %162 = vmatprep.subr.bf16.mxu0 0
  %163 = vmatpush1.bf16.msra.mxu0 %v145
  %164 = vmatprep.subr.bf16.mxu0 0
  %165 = vmatpush1.bf16.msra.mxu0 %v146
  %166 = vmatprep.subr.bf16.mxu0 0
  %167 = vmatpush1.bf16.msra.mxu0 %v147
  %168 = vmatprep.subr.bf16.mxu0 0
  %169 = vmatpush1.bf16.msra.mxu0 %v148
  %170 = vmatprep.subr.bf16.mxu0 0
  %171 = vmatpush1.bf16.msra.mxu0 %v149
  %172 = vmatprep.subr.bf16.mxu0 0
  %173 = vmatpush1.bf16.msra.mxu0 %v150
  %174 = vmatprep.subr.bf16.mxu0 0
  %175 = vmatpush1.bf16.msra.mxu0 %v151
  %176 = vmatprep.subr.bf16.mxu0 0
  %177 = vmatpush1.bf16.msra.mxu0 0
  %178 = vmatprep.subr.bf16.mxu0 0
  %179 = vmatpush1.bf16.msra.mxu0 0
  %180 = vmatprep.subr.bf16.mxu0 0
  %181 = vmatpush1.bf16.msra.mxu0 0
  %182 = vmatprep.subr.bf16.mxu0 0
  %183 = vmatpush1.bf16.msra.mxu0 0
  %184 = vmatprep.subr.bf16.mxu0 0
  %185 = vmatpush1.bf16.msra.mxu0 0
  %186 = vmatprep.subr.bf16.mxu0 0
  %187 = vmatpush1.bf16.msra.mxu0 0
  %188 = vmatprep.subr.bf16.mxu0 0
  %189 = vmatpush1.bf16.msra.mxu0 0
  %190 = vmatprep.subr.bf16.mxu0 0
  %191 = vmatpush1.bf16.msra.mxu0 0
  %192 = vmatprep.mubr.bf16.mxu0 0
  %193 = vmatmul.mubr.bf16.gmra.mrb[0].mxu0 %v88
  %v194 = vpop.f32.mrb[0].mxu0
  %v195 = vadd.f32 %v110, %v194
  %v196 = vpop.f32.mrb[0].mxu0
  %v197 = vpop.f32.mrb[0].mxu0
  %v198 = vpop.f32.mrb[0].mxu0
  %199 = vdwg.mxu0
  %v200 = vmax.f32 %v195, 0.0
  %v201 = vpack.c.bf16 %v200, %v200
  %v202 = vld [vmem:[%s5] sm:$0xf]
  %v203 = vld [vmem:[%s5 + $0x4] sm:$0xf]
  %v204 = vld [vmem:[%s5 + $0x8] sm:$0xf]
  %v205 = vld [vmem:[%s5 + $0xc] sm:$0xf]
  %v206 = vld [vmem:[%s5 + $0x10] sm:$0xf]
  %v207 = vld [vmem:[%s5 + $0x14] sm:$0xf]
  %v208 = vld [vmem:[%s5 + $0x18] sm:$0xf]
  %v209 = vld [vmem:[%s5 + $0x1c] sm:$0xf]
  %v210 = vld [vmem:[%s6] sm:$0x1]
  %v212 = vlaneseq
  %v213 = vshrl.u32 %v212, 7
  %v214 = vsub.s32 0, %v213
  %v215 = vrot.slane %v210, %v214
  %v225 = vunpack.c.l.b16 %v202
  %v226 = vunpack.c.l.b16 %v203
  %v227 = vunpack.c.l.b16 %v204
  %v228 = vunpack.c.l.b16 %v205
  %v229 = vunpack.c.l.b16 %v206
  %v230 = vunpack.c.l.b16 %v207
  %v231 = vunpack.c.l.b16 %v208
  %v232 = vunpack.c.l.b16 %v209
  %v233 = vpack.c.b16 %v226, %v225
  %v234 = vpack.c.b16 %v228, %v227
  %v235 = vpack.c.b16 %v230, %v229
  %v236 = vpack.c.b16 %v232, %v231
  %vm241 = vcmask 523264
  %v243 = vsel %vm241, %v201, 0
  %245 = vmatprep.subr.bf16.mxu0 0
  %246 = vmatpush1.bf16.msra.mxu0 %v233
  %247 = vmatprep.subr.bf16.mxu0 0
  %248 = vmatpush1.bf16.msra.mxu0 %v234
  %249 = vmatprep.subr.bf16.mxu0 0
  %250 = vmatpush1.bf16.msra.mxu0 %v235
  %251 = vmatprep.subr.bf16.mxu0 0
  %252 = vmatpush1.bf16.msra.mxu0 %v236
  %253 = vmatprep.subr.bf16.mxu0 0
  %254 = vmatpush1.bf16.msra.mxu0 0
  %255 = vmatprep.subr.bf16.mxu0 0
  %256 = vmatpush1.bf16.msra.mxu0 0
  %257 = vmatprep.subr.bf16.mxu0 0
  %258 = vmatpush1.bf16.msra.mxu0 0
  %259 = vmatprep.subr.bf16.mxu0 0
  %260 = vmatpush1.bf16.msra.mxu0 0
  %261 = vmatprep.subr.bf16.mxu0 0
  %262 = vmatpush1.bf16.msra.mxu0 0
  %263 = vmatprep.subr.bf16.mxu0 0
  %264 = vmatpush1.bf16.msra.mxu0 0
  %265 = vmatprep.subr.bf16.mxu0 0
  %266 = vmatpush1.bf16.msra.mxu0 0
  %267 = vmatprep.subr.bf16.mxu0 0
  %268 = vmatpush1.bf16.msra.mxu0 0
  %269 = vmatprep.subr.bf16.mxu0 0
  %270 = vmatpush1.bf16.msra.mxu0 0
  %271 = vmatprep.subr.bf16.mxu0 0
  %272 = vmatpush1.bf16.msra.mxu0 0
  %273 = vmatprep.subr.bf16.mxu0 0
  %274 = vmatpush1.bf16.msra.mxu0 0
  %275 = vmatprep.subr.bf16.mxu0 0
  %276 = vmatpush1.bf16.msra.mxu0 0
  %277 = vmatprep.mubr.bf16.mxu0 0
  %278 = vmatmul.mubr.bf16.gmra.mrb[0].mxu0 %v243
  %v279 = vpop.f32.mrb[0].mxu0
  %v280 = vadd.f32 %v215, %v279
  %v281 = vpop.f32.mrb[0].mxu0
  %v282 = vpop.f32.mrb[0].mxu0
  %v283 = vpop.f32.mrb[0].mxu0
  %284 = vdwg.mxu0
  %285 = vmax.xlane.f32.xlu0 %v280
  %v286 = vpop.xlane.xlu0 %285
  %v287 = vsub.f32 %v280, %v286
  %v288 = vmul.f32 %v287, 1.442695
  %v289 = vpow.pop %v288
  %290 = vadd.xlane.f32.xlu0 %v289
  %v291 = vpop.xlane.xlu0 %290
  %v292 = vrcp.pop %v291
  %v293 = vmul.f32 %v289, %v292
  %294 = vst [vmem:[%s7] sm:$0xff] %v293
  // Predicated region
  $region30: #{_lambda_.1} parent=0 // pred_check
    _
  $region31: #{_lambda_.1} parent=0 // pred_check_branch
    %296 = sbr.rel (0) target = $region33
  $region32: #{_lambda_.1} parent=0 // pred_region
    _
  $region33: #{_lambda_.1} parent=0 // pred_fallthru
    _
  // Predicated region
  $region34: #{_lambda_.1} parent=0 // pred_check
    _
  $region35: #{_lambda_.1} parent=0 // pred_check_branch
    %298 = sbr.rel (0) target = $region37
  $region36: #{_lambda_.1} parent=0 // pred_region
    _
  $region37: #{_lambda_.1} parent=0 // pred_fallthru
    _

</llo_original>
